<compile_context>
chip_gen: v7x
topology: tpu7x:2x2x1
jax: 0.10.0
libtpu: 0.0.40
codegen_flags: <defaults>
</compile_context>

<pallas_src>
import functools

import jax
import jax.numpy as jnp
from jax.experimental import pallas as pl
from jax.experimental.pallas import tpu as pltpu

ALPHA = 0.25
GAMMA = 2.0          # GAMMA == 2.0 -> implemented as a square (avoids pow lowering in-kernel)
IGNORE_INDEX = 6


def _focal_loss_kernel(logits_ref, targets_ref, out_ref, sum_acc, cnt_acc):
    n = pl.program_id(0)
    j = pl.program_id(1)

    @pl.when(jnp.logical_and(n == 0, j == 0))
    def _():
        sum_acc[...] = jnp.zeros_like(sum_acc)
        cnt_acc[...] = jnp.zeros_like(cnt_acc)

    x = logits_ref[0].astype(jnp.float32)           # (C, T)  classes on sublanes
    t = targets_ref[0]                               # (1, T)  int32

    # log-softmax over the class (sublane) axis, per pixel (lane)
    m = jnp.max(x, axis=0, keepdims=True)                                # (1, T)
    lse = m + jnp.log(jnp.sum(jnp.exp(x - m), axis=0, keepdims=True))    # (1, T)

    # gather target-class logit via one-hot select (no dynamic gather on TPU)
    cls = jax.lax.broadcasted_iota(jnp.int32, x.shape, 0)                # (C, T)
    tgt_logit = jnp.sum(jnp.where(cls == t, x, 0.0), axis=0, keepdims=True)  # (1, T)

    valid = (t != IGNORE_INDEX)                                          # (1, T)
    ce = jnp.where(valid, lse - tgt_logit, 0.0)                          # (1, T)

    # elementwise vector accumulation (no per-step scalar reduce / carry)
    sum_acc[...] += ce
    cnt_acc[...] += valid.astype(jnp.float32)

    @pl.when(jnp.logical_and(n == pl.num_programs(0) - 1,
                             j == pl.num_programs(1) - 1))
    def _():
        ce_mean = jnp.sum(sum_acc[...]) / jnp.sum(cnt_acc[...])
        exp_loss = jnp.exp(-ce_mean)
        mod = 1.0 - exp_loss
        out_ref[0, 0] = ALPHA * (mod * mod) * ce_mean   # (1 - e^{-ce})^GAMMA, GAMMA=2


@functools.partial(jax.jit, static_argnames=("tile_hw",))
def focal_loss(inputs_nchw, targets_nhw, *, tile_hw=131072):
    """inputs_nchw: (N, C, H, W) float logits; targets_nhw: (N, H, W) int targets."""
    N, C, H, W = inputs_nchw.shape
    HW = H * W

    # Free reshape of contiguous NCHW (no transpose / extra HBM pass).
    logits = inputs_nchw.reshape(N, C, HW)
    targets = targets_nhw.reshape(N, 1, HW).astype(jnp.int32)

    # Lane-align the tile (last block dim must be a multiple of 128) and cap it
    # so a double-buffered f32 logits block stays well under the scoped-VMEM
    # limit even for larger C.
    bytes_per_pixel = max(1, C) * 4
    cap_by_vmem = max(128, ((6 << 20) // bytes_per_pixel) // 128 * 128)
    tile = min(int(tile_hw), cap_by_vmem, pl.cdiv(HW, 128) * 128)
    tile = max(tile, 128)

    hw_pad = pl.cdiv(HW, tile) * tile
    if hw_pad != HW:
        pad = hw_pad - HW
        logits = jnp.pad(logits, ((0, 0), (0, 0), (0, pad)))
        # padded pixels get IGNORE_INDEX so the valid mask drops them
        targets = jnp.pad(targets, ((0, 0), (0, 0), (0, pad)),
                          constant_values=IGNORE_INDEX)

    num_tiles = hw_pad // tile
    grid = (N, num_tiles)

    out = pl.pallas_call(
        _focal_loss_kernel,
        out_shape=jax.ShapeDtypeStruct((1, 1), jnp.float32),
        grid_spec=pltpu.PrefetchScalarGridSpec(
            num_scalar_prefetch=0,
            grid=grid,
            in_specs=[
                pl.BlockSpec((1, C, tile), lambda n, j: (n, 0, j)),
                pl.BlockSpec((1, 1, tile), lambda n, j: (n, 0, j)),
            ],
            out_specs=pl.BlockSpec(memory_space=pltpu.MemorySpace.SMEM),
            scratch_shapes=[
                pltpu.VMEM((1, tile), jnp.float32),   # running per-lane CE sum
                pltpu.VMEM((1, tile), jnp.float32),   # running per-lane valid count
            ],
        ),
        compiler_params=pltpu.CompilerParams(
            # accumulators carry across both grid axes -> sequential on one TC
            dimension_semantics=("arbitrary", "arbitrary"),
            vmem_limit_bytes=64 * 1024 * 1024,
        ),
    )(logits, targets)
    return out[0, 0]


def _focal_loss_ref(inputs_nchw, targets_nhw):
    N, C, H, W = inputs_nchw.shape
    logits = jnp.transpose(inputs_nchw, (0, 2, 3, 1)).reshape(-1, C).astype(jnp.float32)
    t = targets_nhw.reshape(-1).astype(jnp.int32)
    lse = jax.nn.logsumexp(logits, axis=-1)
    tgt = jnp.take_along_axis(logits, jnp.clip(t, 0, C - 1)[:, None], axis=-1)[:, 0]
    valid = (t != IGNORE_INDEX)
    ce = jnp.sum(jnp.where(valid, lse - tgt, 0.0)) / jnp.sum(valid.astype(jnp.float32))
    return ALPHA * (1.0 - jnp.exp(-ce)) ** GAMMA * ce


if __name__ == "__main__":
    key = jax.random.PRNGKey(0)
    k1, k2 = jax.random.split(key)

    N, C, H, W = 2, 8, 16, 16          # 8 classes; ignore_index=6 is a valid label value
    inputs = jax.random.normal(k1, (N, C, H, W), dtype=jnp.float32)
    targets = jax.random.randint(k2, (N, H, W), 0, C, dtype=jnp.int32)  # includes 6s -> ignored

    loss = focal_loss(inputs, targets)
    jax.block_until_ready(loss)

    ref = _focal_loss_ref(inputs, targets)
    assert jnp.allclose(loss, ref, rtol=1e-5, atol=1e-5), (loss, ref)

    print("KERNEL_OK")
</pallas_src>

<mosaic_0001>
module attributes {stable_mosaic.version = 11 : i64} {
  func.func @_focal_loss_kernel(%arg0: i32, %arg1: i32, %arg2: memref<1x8x256xf32, #tpu.memory_space<vmem>>, %arg3: memref<1x1x256xi32, #tpu.memory_space<vmem>>, %arg4: memref<1x1xf32, #tpu.memory_space<smem>>, %arg5: memref<1x256xf32, #tpu.memory_space<vmem>>, %arg6: memref<1x256xf32, #tpu.memory_space<vmem>>) attributes {dimension_semantics = [#tpu.dimension_semantics<arbitrary>, #tpu.dimension_semantics<arbitrary>], iteration_bounds = array<i64: 2, 1>, scalar_prefetch = 0 : i64, scratch_operands = 2 : i64, tpu.core_type = #tpu.core_type<tc>, window_params = [{transform_indices = @transform_0, window_bounds = array<i64: 1, 8, 256>}, {transform_indices = @transform_1, window_bounds = array<i64: 1, 1, 256>}, {transform_indices = @transform_2, window_bounds = array<i64: 1, 1>}]} {
    %c0_i32 = arith.constant 0 : i32
    %0 = arith.cmpi eq, %arg0, %c0_i32 : i32
    %c0_i32_0 = arith.constant 0 : i32
    %1 = arith.cmpi eq, %arg1, %c0_i32_0 : i32
    %2 = arith.andi %0, %1 : i1
    %3 = arith.extui %2 : i1 to i32
    %c0_i32_1 = arith.constant 0 : i32
    %4 = arith.cmpi ne, %3, %c0_i32_1 : i32
    scf.if %4 {
      %cst_21 = arith.constant 0.000000e+00 : f32
      %43 = vector.broadcast %cst_21 : f32 to vector<1x256xf32>
      %c0_22 = arith.constant 0 : index
      %c0_23 = arith.constant 0 : index
      %44 = vector.load %arg5[%c0_22, %c0_23] : memref<1x256xf32, #tpu.memory_space<vmem>>, vector<1x256xf32>
      tpu.vector_store %arg5[%c0_22, %c0_23], %43 {strides = array<i32>} : memref<1x256xf32, #tpu.memory_space<vmem>>, vector<1x256xf32>,
      %cst_24 = arith.constant 0.000000e+00 : f32
      %45 = vector.broadcast %cst_24 : f32 to vector<1x256xf32>
      %c0_25 = arith.constant 0 : index
      %c0_26 = arith.constant 0 : index
      %46 = vector.load %arg6[%c0_25, %c0_26] : memref<1x256xf32, #tpu.memory_space<vmem>>, vector<1x256xf32>
      tpu.vector_store %arg6[%c0_25, %c0_26], %45 {strides = array<i32>} : memref<1x256xf32, #tpu.memory_space<vmem>>, vector<1x256xf32>,
    } else {
    }
    %c0 = arith.constant 0 : index
    %c0_2 = arith.constant 0 : index
    %c0_3 = arith.constant 0 : index
    %5 = vector.load %arg2[%c0, %c0_2, %c0_3] : memref<1x8x256xf32, #tpu.memory_space<vmem>>, vector<1x8x256xf32>
    %6 = vector.shape_cast %5 : vector<1x8x256xf32> to vector<8x256xf32>
    %c0_4 = arith.constant 0 : index
    %c0_5 = arith.constant 0 : index
    %c0_6 = arith.constant 0 : index
    %7 = vector.load %arg3[%c0_4, %c0_5, %c0_6] : memref<1x1x256xi32, #tpu.memory_space<vmem>>, vector<1x1x256xi32>
    %8 = vector.shape_cast %7 : vector<1x1x256xi32> to vector<1x256xi32>
    %cst = arith.constant dense<0xFF800000> : vector<256xf32>
    %9 = vector.multi_reduction <maximumf>, %6, %cst [0] : vector<8x256xf32> to vector<256xf32>
    %10 = vector.shape_cast %9 : vector<256xf32> to vector<1x256xf32>
    %11 = vector.broadcast %10 : vector<1x256xf32> to vector<8x256xf32>
    %12 = arith.subf %6, %11 : vector<8x256xf32>
    %13 = math.exp %12 : vector<8x256xf32>
    %cst_7 = arith.constant dense<0.000000e+00> : vector<256xf32>
    %14 = vector.multi_reduction <add>, %13, %cst_7 [0] : vector<8x256xf32> to vector<256xf32>
    %15 = vector.shape_cast %14 : vector<256xf32> to vector<1x256xf32>
    %16 = math.log %15 : vector<1x256xf32>
    %17 = arith.addf %10, %16 : vector<1x256xf32>
    %18 = tpu.iota {dimensions = array<i32: 0>} : vector<8x256xi32>
    %19 = vector.broadcast %8 : vector<1x256xi32> to vector<8x256xi32>
    %20 = arith.cmpi eq, %18, %19 : vector<8x256xi32>
    %cst_8 = arith.constant 0.000000e+00 : f32
    %21 = vector.broadcast %cst_8 : f32 to vector<8x256xf32>
    %22 = arith.select %20, %6, %21 : vector<8x256xi1>, vector<8x256xf32>
    %cst_9 = arith.constant dense<0.000000e+00> : vector<256xf32>
    %23 = vector.multi_reduction <add>, %22, %cst_9 [0] : vector<8x256xf32> to vector<256xf32>
    %24 = vector.shape_cast %23 : vector<256xf32> to vector<1x256xf32>
    %c6_i32 = arith.constant 6 : i32
    %25 = vector.broadcast %c6_i32 : i32 to vector<1x256xi32>
    %26 = arith.cmpi ne, %8, %25 : vector<1x256xi32>
    %27 = arith.subf %17, %24 : vector<1x256xf32>
    %cst_10 = arith.constant 0.000000e+00 : f32
    %28 = vector.broadcast %cst_10 : f32 to vector<1x256xf32>
    %29 = arith.select %26, %27, %28 : vector<1x256xi1>, vector<1x256xf32>
    %c0_11 = arith.constant 0 : index
    %c0_12 = arith.constant 0 : index
    %30 = vector.load %arg5[%c0_11, %c0_12] : memref<1x256xf32, #tpu.memory_space<vmem>>, vector<1x256xf32>
    %31 = arith.addf %30, %29 : vector<1x256xf32>
    %c0_13 = arith.constant 0 : index
    %c0_14 = arith.constant 0 : index
    %32 = vector.load %arg5[%c0_13, %c0_14] : memref<1x256xf32, #tpu.memory_space<vmem>>, vector<1x256xf32>
    tpu.vector_store %arg5[%c0_13, %c0_14], %31 {strides = array<i32>} : memref<1x256xf32, #tpu.memory_space<vmem>>, vector<1x256xf32>,
    %c0_15 = arith.constant 0 : index
    %c0_16 = arith.constant 0 : index
    %33 = vector.load %arg6[%c0_15, %c0_16] : memref<1x256xf32, #tpu.memory_space<vmem>>, vector<1x256xf32>
    %34 = arith.extui %26 : vector<1x256xi1> to vector<1x256xi32>
    %35 = arith.sitofp %34 : vector<1x256xi32> to vector<1x256xf32>
    %36 = arith.addf %33, %35 : vector<1x256xf32>
    %c0_17 = arith.constant 0 : index
    %c0_18 = arith.constant 0 : index
    %37 = vector.load %arg6[%c0_17, %c0_18] : memref<1x256xf32, #tpu.memory_space<vmem>>, vector<1x256xf32>
    tpu.vector_store %arg6[%c0_17, %c0_18], %36 {strides = array<i32>} : memref<1x256xf32, #tpu.memory_space<vmem>>, vector<1x256xf32>,
    %c1_i32 = arith.constant 1 : i32
    %38 = arith.cmpi eq, %arg0, %c1_i32 : i32
    %c0_i32_19 = arith.constant 0 : i32
    %39 = arith.cmpi eq, %arg1, %c0_i32_19 : i32
    %40 = arith.andi %38, %39 : i1
    %41 = arith.extui %40 : i1 to i32
    %c0_i32_20 = arith.constant 0 : i32
    %42 = arith.cmpi ne, %41, %c0_i32_20 : i32
    scf.if %42 {
      %c0_21 = arith.constant 0 : index
      %c0_22 = arith.constant 0 : index
      %43 = vector.load %arg5[%c0_21, %c0_22] : memref<1x256xf32, #tpu.memory_space<vmem>>, vector<1x256xf32>
      %44 = vector.shape_cast %43 : vector<1x256xf32> to vector<1x1x256xf32>
      %cst_23 = arith.constant dense<0.000000e+00> : vector<1xf32>
      %45 = vector.multi_reduction <add>, %44, %cst_23 [1, 2] : vector<1x1x256xf32> to vector<1xf32>
      %46 = vector.shape_cast %45 : vector<1xf32> to vector<1x1x1xf32>
      %47 = vector.extract %46[0, 0, 0] : f32 from vector<1x1x1xf32>
      %c0_24 = arith.constant 0 : index
      %c0_25 = arith.constant 0 : index
      %48 = vector.load %arg6[%c0_24, %c0_25] : memref<1x256xf32, #tpu.memory_space<vmem>>, vector<1x256xf32>
      %49 = vector.shape_cast %48 : vector<1x256xf32> to vector<1x1x256xf32>
      %cst_26 = arith.constant dense<0.000000e+00> : vector<1xf32>
      %50 = vector.multi_reduction <add>, %49, %cst_26 [1, 2] : vector<1x1x256xf32> to vector<1xf32>
      %51 = vector.shape_cast %50 : vector<1xf32> to vector<1x1x1xf32>
      %52 = vector.extract %51[0, 0, 0] : f32 from vector<1x1x1xf32>
      %53 = arith.divf %47, %52 : f32
      %cst_27 = arith.constant 0.000000e+00 : f32
      %54 = arith.subf %cst_27, %53 : f32
      %55 = math.exp %54 : f32
      %cst_28 = arith.constant 1.000000e+00 : f32
      %56 = arith.subf %cst_28, %55 : f32
      %57 = arith.mulf %56, %56 : f32
      %cst_29 = arith.constant 2.500000e-01 : f32
      %58 = arith.mulf %cst_29, %57 : f32
      %59 = arith.mulf %58, %53 : f32
      %c0_30 = arith.constant 0 : index
      %c0_31 = arith.constant 0 : index
      %60 = memref.load %arg4[%c0_30, %c0_31] : memref<1x1xf32, #tpu.memory_space<smem>>
      memref.store %59, %arg4[%c0_30, %c0_31] : memref<1x1xf32, #tpu.memory_space<smem>>
    } else {
    }
    return
  }
  func.func @transform_0(%arg0: i32, %arg1: i32) -> (i32, i32, i32) {
    %c0_i32 = arith.constant 0 : i32
    %c0_i32_0 = arith.constant 0 : i32
    return %arg0, %c0_i32, %arg1 : i32, i32, i32
  }
  func.func @transform_1(%arg0: i32, %arg1: i32) -> (i32, i32, i32) {
    %c0_i32 = arith.constant 0 : i32
    %c0_i32_0 = arith.constant 0 : i32
    return %arg0, %c0_i32, %arg1 : i32, i32, i32
  }
  func.func @transform_2(%arg0: i32, %arg1: i32) -> (i32, i32) {
    %c0_i32 = arith.constant 0 : i32
    %c0_i32_0 = arith.constant 0 : i32
    %c0_i32_1 = arith.constant 0 : i32
    return %c0_i32, %c0_i32_0 : i32, i32
  }
}

</mosaic_0001>

<llo_original>
// kernel: focal_loss.1
$region0: #{focal_loss.1}
  #allocation0 [shape = 'u32[]', space=smem, size = 0x4, offset = 0x4, fixed_abs, tag = 'smem constant byte address 0x4 - core index']
  #allocation1 [shape = 'u32[144,128]{1,0:T(1,128)}', space=vmem, size = 0x12000, scoped, tag = 'internal scratch']
  #allocation2 [shape = 'f32[1,256]{1,0:T(1,128)}', space=vmem, size = 0x400, scoped, tag = 'scratch operand']
  #allocation3 [shape = 'f32[1,256]{1,0:T(1,128)}', space=vmem, size = 0x400, scoped, tag = 'scratch operand']
  %s0 = inlined_call_operand.hbm [shape: f32[2,8,256], index: 0, kind: input, shape index: {}]
  %s1 = inlined_call_operand.hbm [shape: s32[2,1,256], index: 1, kind: input, shape index: {}]
  %s2 = inlined_call_operand.hbm [shape: f32[1,1], index: 2, kind: output, shape index: {}]
  %s3 = sld [smem:[#allocation0]]
  $region57: #{focal_loss.1} parent=0
    _
  %s5 = ssub.s32 1, %s3
  %s6 = scalar_select 0, %s5, %s3
  $region1: #{focal_loss.1} parent=0
    #allocation4 [shape = 'u8[16384]{0}', space=vmem, size = 0x4000, scoped, tag = 'input window, operand 0']
    #allocation5 [shape = 's32[2]{0}', space=sflag, size = 0x8, scoped, tag = 'scoped memory for focal_loss.1']
    #allocation6 [shape = 's32[2]{0}', space=sflag, size = 0x8, scoped, tag = 'scoped memory for focal_loss.1']
    #allocation7 [shape = 'u8[2048]{0}', space=vmem, size = 0x800, scoped, tag = 'input window, operand 1']
    #allocation8 [shape = 's32[2]{0}', space=sflag, size = 0x8, scoped, tag = 'scoped memory for focal_loss.1']
    #allocation9 [shape = 'u8[512]{0}', space=smem, size = 0x200, scoped, tag = 'output window, operand 0, single buffered']
    %7 = vsyncpa [#allocation5], 0
    %s8 = scalar_lea.sflag [#allocation5], 1
    %9 = vsyncpa %s8, 0
    %10 = vsyncpa [#allocation8], 0
    %s11 = scalar_lea.sflag [#allocation8], 1
    %12 = vsyncpa %s11, 0
    %13 = vsyncpa [#allocation6], 0
    loop: start=0, step=1, limit=4
    $region2: #{focal_loss.1} parent=1 // loop_pre_header
      _
    $region3: #{focal_loss.1} parent=1 // loop_header
      %s15 = sphi 0, %s19
      %p16 = scmp.ge.s32.totalorder %s15, 4
      %s22 = sphi 0, %s34
      %s23 = sphi 0, %s30
      %s24 = sphi 0, %s22
      %s25 = sphi 0, %s23
      %s26 = sphi 0, %s24
      %s27 = sphi 0, %s25
      %s39 = sphi 0, %s41
      %s42 = sphi 0, %s39
      %s43 = sphi 0, %s42
      %s59 = sphi 0, %s43
      %s67 = sphi 0, %s69
      %s70 = sphi 0, %s67
      %s71 = sphi 0, %s70
      %s87 = sphi 0, %s71
      %s91 = sphi 0, %s91
      %s93 = sphi 0, %s91
      %s94 = sphi 0, %s93
      %s108 = sphi 0, %s94
    $region4: #{focal_loss.1} parent=1 // loop_header_branch
      %18 = sbr.rel (%p16) target = $region8
    $region5: #{focal_loss.1} parent=1 // loop_body
      %s20 = ssub.s32 %s15, 1
      %s21 = ssub.s32 %s15, 2
      %s28 = sadd.s32 1, %s23
      %p29 = scmp.ge.s32.totalorder %s28, 1
      %s30 = scalar_select %p29, 0, %s28
      %s31 = sadd.s32 1, %s22
      %s32 = scalar_select %p29, %s31, %s22
      %p33 = scmp.ge.s32.totalorder %s32, 2
      %s34 = scalar_select %p33, 0, %s32
      %s35 = ssub.s32 %s22, %s34
      %s36 = ssub.s32 %s23, %s30
      %s37 = sor.u32 %s35, %s36
      %p38 = scmp.eq.s32.totalorder %s37, 0
      %s40 = sadd.s32 %s39, 1
      %s41 = scalar_select %p38, %s39, %s40
      %p44 = pneg %p38
      %p45 = scmp.eq.s32.totalorder %s15, 1
      %p46 = por %p44, %p45
      %p47 = scmp.ne.s32.totalorder %s39, %s42
      %p48 = scmp.eq.s32.totalorder %s15, 0
      %p49 = por %p47, %p48
      %p50 = scmp.ne.s32.totalorder %s39, %s42
      %p51 = scmp.eq.s32.totalorder %s20, 1
      %p52 = por %p50, %p51
      %p53 = scmp.ne.s32.totalorder %s42, %s43
      %p54 = scmp.eq.s32.totalorder %s20, 0
      %p55 = por %p53, %p54
      %p56 = scmp.ne.s32.totalorder %s42, %s43
      %p57 = scmp.eq.s32.totalorder %s21, 1
      %p58 = por %p56, %p57
      %p60 = scmp.ne.s32.totalorder %s43, %s59
      %p61 = scmp.eq.s32.totalorder %s21, 0
      %p62 = por %p60, %p61
      %s63 = ssub.s32 %s22, %s34
      %s64 = ssub.s32 %s23, %s30
      %s65 = sor.u32 %s63, %s64
      %p66 = scmp.eq.s32.totalorder %s65, 0
      %s68 = sadd.s32 %s67, 1
      %s69 = scalar_select %p66, %s67, %s68
      %p72 = pneg %p66
      %p73 = scmp.eq.s32.totalorder %s15, 1
      %p74 = por %p72, %p73
      %p75 = scmp.ne.s32.totalorder %s67, %s70
      %p76 = scmp.eq.s32.totalorder %s15, 0
      %p77 = por %p75, %p76
      %p78 = scmp.ne.s32.totalorder %s67, %s70
      %p79 = scmp.eq.s32.totalorder %s20, 1
      %p80 = por %p78, %p79
      %p81 = scmp.ne.s32.totalorder %s70, %s71
      %p82 = scmp.eq.s32.totalorder %s20, 0
      %p83 = por %p81, %p82
      %p84 = scmp.ne.s32.totalorder %s70, %s71
      %p85 = scmp.eq.s32.totalorder %s21, 1
      %p86 = por %p84, %p85
      %p88 = scmp.ne.s32.totalorder %s71, %s87
      %p89 = scmp.eq.s32.totalorder %s21, 0
      %p90 = por %p88, %p89
      %s92 = sadd.s32 %s91, 1
      %p95 = scmp.eq.s32.totalorder %s15, 1
      %p96 = scmp.ne.s32.totalorder %s91, %s93
      %p97 = scmp.eq.s32.totalorder %s15, 0
      %p98 = por %p96, %p97
      %p99 = scmp.ne.s32.totalorder %s91, %s93
      %p100 = scmp.eq.s32.totalorder %s20, 1
      %p101 = por %p99, %p100
      %p102 = scmp.ne.s32.totalorder %s93, %s94
      %p103 = scmp.eq.s32.totalorder %s20, 0
      %p104 = por %p102, %p103
      %p105 = scmp.ne.s32.totalorder %s93, %s94
      %p106 = scmp.eq.s32.totalorder %s21, 1
      %p107 = por %p105, %p106
      %p109 = scmp.ne.s32.totalorder %s94, %s108
      %p110 = scmp.eq.s32.totalorder %s21, 0
      %p111 = por %p109, %p110
      %p112 = scmp.le.s32.totalorder 1, %s15
      %p113 = scmp.lt.s32.totalorder %s15, 3
      %p114 = pnand %p112, %p113
      %p115 = pneg %p114
      // Predicated region
      $region9: #{focal_loss.1} parent=5 // pred_check
        _
      $region10: #{focal_loss.1} parent=5 // pred_check_branch
        %117 = sbr.rel (%p114) target = $region12
      $region11: #{focal_loss.1} parent=5 // pred_region
        %s118 = ssub.s32 %s15, 1
      $region12: #{focal_loss.1} parent=5 // pred_fallthru
        _
      %p119 = scmp.lt.s32.totalorder %s15, 2
      // Predicated region
      $region13: #{focal_loss.1} parent=5 // pred_check
        %p120 = pneg %p119
      $region14: #{focal_loss.1} parent=5 // pred_check_branch
        %122 = sbr.rel (%p120) target = $region16
      $region15: #{focal_loss.1} parent=5 // pred_region
        // Predicated region
        $region17: #{focal_loss.1} parent=15 // pred_check
          %p123 = pneg %p49
        $region18: #{focal_loss.1} parent=15 // pred_check_branch
          %125 = sbr.rel (%p123) target = $region20
        $region19: #{focal_loss.1} parent=15 // pred_region
          %s126 = sand.u32 %s39, 1
          %s127 = scalar_lea.sflag [#allocation5], %s126
          %s128 = sand.u32 %s39, 1
          %s129 = smul.addr %s128, 16
          %s130 = scalar_lea.vmem [#allocation4], %s129
          %s131 = smul.u32 2, %s23
          %s133 = ssub.s32 256, 256
          %134 = vsyncadd %s127, %s133
          %s135 = smul.addr %s22, 2
          %s136 = sadd.s32 %s131, %s135
          %s137 = smul.addr %s136, 128
          %s138 = scalar_lea.hbm %s0, %s137
          %s140 = sshll.u32 %s130, 4
          %s141 = int_to_ptr.vmem [resolvable:$true] %s140
          %143 = dma.hbm_to_vmem [thread:$0]  %s138, 256, %s141, %s127
        $region20: #{focal_loss.1} parent=15 // pred_fallthru
          _
        // Predicated region
        $region21: #{focal_loss.1} parent=15 // pred_check
          %p144 = pneg %p77
        $region22: #{focal_loss.1} parent=15 // pred_check_branch
          %146 = sbr.rel (%p144) target = $region24
        $region23: #{focal_loss.1} parent=15 // pred_region
          %s147 = sand.u32 %s67, 1
          %s148 = scalar_lea.sflag [#allocation8], %s147
          %s149 = sand.u32 %s67, 1
          %s150 = smul.addr %s149, 2
          %s151 = scalar_lea.vmem [#allocation7], %s150
          %s152 = smul.u32 2, %s23
          %s154 = ssub.s32 32, 32
          %155 = vsyncadd %s148, %s154
          %s156 = smul.addr %s22, 2
          %s157 = sadd.s32 %s152, %s156
          %s158 = smul.addr %s157, 16
          %s159 = scalar_lea.hbm %s1, %s158
          %s161 = sshll.u32 %s151, 4
          %s162 = int_to_ptr.vmem [resolvable:$true] %s161
          %164 = dma.hbm_to_vmem [thread:$0]  %s159, 32, %s162, %s148
        $region24: #{focal_loss.1} parent=15 // pred_fallthru
          _
      $region16: #{focal_loss.1} parent=5 // pred_fallthru
        _
      %p165 = scmp.le.s32.totalorder 1, %s15
      %p166 = scmp.lt.s32.totalorder %s15, 3
      %p167 = pnand %p165, %p166
      %p168 = pneg %p167
      // Predicated region
      $region25: #{focal_loss.1} parent=5 // pred_check
        _
      $region26: #{focal_loss.1} parent=5 // pred_check_branch
        %170 = sbr.rel (%p167) target = $region28
      $region27: #{focal_loss.1} parent=5 // pred_region
        %s171 = ssub.s32 %s15, 1
        %s172 = sand.u32 %s42, 1
        %s173 = scalar_lea.sflag [#allocation5], %s172
        %s174 = sand.u32 %s42, 1
        %s175 = smul.addr %s174, 16
        %s176 = scalar_lea.vmem [#allocation4], %s175
        // Predicated region
        $region29: #{focal_loss.1} parent=27 // pred_check
          %p177 = pneg %p55
        $region30: #{focal_loss.1} parent=27 // pred_check_branch
          %179 = sbr.rel (%p177) target = $region32
        $region31: #{focal_loss.1} parent=27 // pred_region
          %180 = dma.done %s173, 256
        $region32: #{focal_loss.1} parent=27 // pred_fallthru
          _
        %s181 = sand.u32 %s70, 1
        %s182 = scalar_lea.sflag [#allocation8], %s181
        %s183 = sand.u32 %s70, 1
        %s184 = smul.addr %s183, 2
        %s185 = scalar_lea.vmem [#allocation7], %s184
        // Predicated region
        $region33: #{focal_loss.1} parent=27 // pred_check
          %p186 = pneg %p83
        $region34: #{focal_loss.1} parent=27 // pred_check_branch
          %188 = sbr.rel (%p186) target = $region36
        $region35: #{focal_loss.1} parent=27 // pred_region
          %189 = dma.done %s182, 32
        $region36: #{focal_loss.1} parent=27 // pred_fallthru
          _
        %s190 = sand.u32 %s42, 1
        %s191 = scalar_lea.sflag [#allocation5], %s190
        %s192 = sand.u32 %s42, 1
        %s193 = smul.addr %s192, 16
        %s194 = scalar_lea.vmem [#allocation4], %s193
        %p195 = pneg %p55
        %p196 = pneg %p52
        %s197 = sand.u32 %s70, 1
        %s198 = scalar_lea.sflag [#allocation8], %s197
        %s199 = sand.u32 %s70, 1
        %s200 = smul.addr %s199, 2
        %s201 = scalar_lea.vmem [#allocation7], %s200
        %p202 = pneg %p83
        %p203 = pneg %p80
        %p204 = pneg %p104
        %p205 = pneg %p101
        %s206 = smul.u32 2, %s25
        %s207 = smul.u32 2, %s25
        %p208 = scmp.eq.s32.totalorder %s24, 0
        %p209 = scmp.eq.s32.totalorder %s25, 0
        %p210 = pnand %p208, %p209
        %p211 = pneg %p210
        // Predicated region
        $region37: #{focal_loss.1} parent=27 // pred_check
          _
        $region38: #{focal_loss.1} parent=27 // pred_check_branch
          %213 = sbr.rel (%p210) target = $region40
        $region39: #{focal_loss.1} parent=27 // pred_region
          %v214 = vlaneseq
          %vm215 = vcmp.ge.s32.totalorder %v214, 0
          %vm216 = vcmp.lt.s32.totalorder %v214, 256
          %vm217 = vmand %vm215, %vm216
          %218 = vst.msk [vmem:[#allocation2] sm:$0x3] %vm217, 0.0
          %219 = vst.msk [vmem:[#allocation3] sm:$0x3] %vm217, 0.0
        $region40: #{focal_loss.1} parent=27 // pred_fallthru
          _
        %v220 = vld [vmem:[%s176] sm:$0xff]
        %v221 = vld [vmem:[%s176 + $0x8] sm:$0xff]
        %v222 = vld [vmem:[%s185] sm:$0x3]
        %v223 = vrot.slane %v220, 4
        %v224 = vmax.f32 %v220, %v223
        %v225 = vrot.slane %v224, 2
        %v226 = vmax.f32 %v224, %v225
        %v227 = vrot.slane %v226, 1
        %v228 = vmax.f32 %v226, %v227
        %v229 = vrot.slane %v221, 4
        %v230 = vmax.f32 %v221, %v229
        %v231 = vrot.slane %v230, 2
        %v232 = vmax.f32 %v230, %v231
        %v233 = vrot.slane %v232, 1
        %v234 = vmax.f32 %v232, %v233
        %v235 = vsub.f32 %v220, %v228
        %v236 = vsub.f32 %v221, %v234
        %v237 = vmul.f32 %v235, 1.442695
        %v238 = vpow.pop %v237
        %v239 = vmul.f32 %v236, 1.442695
        %v240 = vpow.pop %v239
        %v241 = vrot.slane %v238, 4
        %v242 = vadd.f32 %v238, %v241
        %v243 = vrot.slane %v242, 2
        %v244 = vadd.f32 %v242, %v243
        %v245 = vrot.slane %v244, 1
        %v246 = vadd.f32 %v244, %v245
        %v247 = vrot.slane %v240, 4
        %v248 = vadd.f32 %v240, %v247
        %v249 = vrot.slane %v248, 2
        %v250 = vadd.f32 %v248, %v249
        %v251 = vrot.slane %v250, 1
        %v252 = vadd.f32 %v250, %v251
        %v253 = vlog2.pop %v246
        %v254 = vmul.f32 %v253, 0.6931472
        %v255 = vlog2.pop %v252
        %v256 = vmul.f32 %v255, 0.6931472
        %v257 = vadd.f32 %v228, %v254
        %v258 = vadd.f32 %v234, %v256
        %v259 = vlaneseq
        %v260 = vshrl.u32 %v259, 7
        %v261 = vlaneseq
        %v262 = vshrl.u32 %v261, 7
        %v263 = vsub.s32 0, %v262
        %v264 = vrot.slane %v222, %v263
        %v265 = vlaneseq
        %v266 = vshrl.u32 %v265, 7
        %v267 = vsub.s32 1, %v266
        %v268 = vrot.slane %v222, %v267
        %vm269 = vcmp.eq.s32.totalorder %v260, %v264
        %vm270 = vcmp.eq.s32.totalorder %v260, %v268
        %v271 = vsel %vm269, %v220, 0.0
        %v272 = vsel %vm270, %v221, 0.0
        %v273 = vrot.slane %v271, 4
        %v274 = vadd.f32 %v271, %v273
        %v275 = vrot.slane %v274, 2
        %v276 = vadd.f32 %v274, %v275
        %v277 = vrot.slane %v276, 1
        %v278 = vadd.f32 %v276, %v277
        %v279 = vrot.slane %v272, 4
        %v280 = vadd.f32 %v272, %v279
        %v281 = vrot.slane %v280, 2
        %v282 = vadd.f32 %v280, %v281
        %v283 = vrot.slane %v282, 1
        %v284 = vadd.f32 %v282, %v283
        %vm285 = vcmp.ne.s32.totalorder %v222, 6
        %v286 = vsub.f32 %v257, %v278
        %v287 = vsub.f32 %v258, %v284
        %v290 = vcombine.low %v286, %v287
        %v292 = vunpack.c.l.s4 1966171168
        %v293 = vunpack.c.0.s8 %v292
        %v294 = vlaneseq
        %v295 = vshrl.u32 %v294, 7
        %v296 = vsub.s32 %v293, %v295
        %v297 = vrot.slane %v290, %v296
        %v299 = vunpack.c.l.s4 1966171168
        %v300 = vunpack.c.0.s8 %v299
        %v301 = vlaneseq
        %v302 = vshrl.u32 %v301, 7
        %v303 = vsub.s32 %v300, %v302
        %v304 = vrot.slane %v297, %v303
        %v306 = vsel %vm285, %v304, 0.0
        %v307 = vld [vmem:[#allocation2] sm:$0x3]
        %v308 = vadd.f32 %v307, %v306
        %v309 = vlaneseq
        %vm310 = vcmp.ge.s32.totalorder %v309, 0
        %vm311 = vcmp.lt.s32.totalorder %v309, 256
        %vm312 = vmand %vm310, %vm311
        %313 = vst.msk [vmem:[#allocation2] sm:$0x3] %vm312, %v308
        %v314 = vld [vmem:[#allocation3] sm:$0x3]
        %v315 = vsel %vm285, 1, 0
        %v316 = vcvt.s32.f32 %v315
        %v317 = vadd.f32 %v314, %v316
        %318 = vst.msk [vmem:[#allocation3] sm:$0x3] %vm312, %v317
        %p319 = scmp.eq.s32.totalorder %s24, 1
        %p320 = pnand %p319, %p209
        %p321 = pneg %p320
        // Predicated region
        $region41: #{focal_loss.1} parent=27 // pred_check
          _
        $region42: #{focal_loss.1} parent=27 // pred_check_branch
          %323 = sbr.rel (%p320) target = $region44
        $region43: #{focal_loss.1} parent=27 // pred_region
          %v324 = vld [vmem:[#allocation2] sm:$0x3]
          %v326 = vlaneseq
          %v327 = vshrl.u32 %v326, 7
          %v328 = vsub.s32 0, %v327
          %v329 = vrot.slane %v324, %v328
          %v330 = vlaneseq
          %v331 = vshrl.u32 %v330, 7
          %v332 = vsub.s32 1, %v331
          %v333 = vrot.slane %v324, %v332
          %vm336 = vcmask 1040384
          %v337 = vsel %vm336, %v329, 0.0
          %v338 = vsel %vm336, %v333, 0.0
          %v339 = vadd.f32 %v337, %v338
          %340 = vadd.xlane.f32.xlu0 %v339
          %v341 = vpop.xlane.xlu0 %340
          %v342 = vrot.slane %v341, 4
          %v343 = vadd.f32 %v341, %v342
          %v344 = vrot.slane %v343, 2
          %v345 = vadd.f32 %v343, %v344
          %v346 = vrot.slane %v345, 1
          %v347 = vadd.f32 %v345, %v346
          %s348 = vtos %v347
          %v349 = vld [vmem:[#allocation3] sm:$0x3]
          %v351 = vlaneseq
          %v352 = vshrl.u32 %v351, 7
          %v353 = vsub.s32 0, %v352
          %v354 = vrot.slane %v349, %v353
          %v355 = vlaneseq
          %v356 = vshrl.u32 %v355, 7
          %v357 = vsub.s32 1, %v356
          %v358 = vrot.slane %v349, %v357
          %v361 = vsel %vm336, %v354, 0.0
          %v362 = vsel %vm336, %v358, 0.0
          %v363 = vadd.f32 %v361, %v362
          %364 = vadd.xlane.f32.xlu0 %v363
          %v365 = vpop.xlane.xlu0 %364
          %v366 = vrot.slane %v365, 4
          %v367 = vadd.f32 %v365, %v366
          %v368 = vrot.slane %v367, 2
          %v369 = vadd.f32 %v367, %v368
          %v370 = vrot.slane %v369, 1
          %v371 = vadd.f32 %v369, %v370
          %s372 = vtos %v371
          %v373 = vstv %s372
          %v374 = vrcp.pop %v373
          %s375 = vtos %v374
          %s376 = smul.f32 %s348, %s375
          %s377 = ssub.f32 0.0, %s376
          %v378 = vstv %s377
          %v379 = vmul.f32 %v378, 1.442695
          %v380 = vpow.pop %v379
          %s381 = vtos %v380
          %s382 = ssub.f32 1.0, %s381
          %s383 = smul.f32 %s382, %s382
          %s384 = smul.f32 %s383, 0.25
          %s385 = smul.f32 %s384, %s376
          %s386 = scalar_lea.smem [#allocation9], 0
          %387 = sst [smem:[%s386]] %s385
        $region44: #{focal_loss.1} parent=27 // pred_fallthru
          _
        // Predicated region
        $region45: #{focal_loss.1} parent=27 // pred_check
          %p388 = pneg %p101
        $region46: #{focal_loss.1} parent=27 // pred_check_branch
          %390 = sbr.rel (%p388) target = $region48
        $region47: #{focal_loss.1} parent=27 // pred_region
          %s392 = ssub.s32 16, 16
          %393 = vsyncadd [#allocation6], %s392
          %396 = dma.smem_to_hbm [#allocation9], 16, %s2, [#allocation6]
        $region48: #{focal_loss.1} parent=27 // pred_fallthru
          _
        // Predicated region
        $region49: #{focal_loss.1} parent=27 // pred_check
          %p397 = pneg %p101
        $region50: #{focal_loss.1} parent=27 // pred_check_branch
          %399 = sbr.rel (%p397) target = $region52
        $region51: #{focal_loss.1} parent=27 // pred_region
          %400 = dma.done [#allocation6], 16
        $region52: #{focal_loss.1} parent=27 // pred_fallthru
          _
        %401 = sfence
      $region28: #{focal_loss.1} parent=5 // pred_fallthru
        _
      %p402 = scmp.le.s32.totalorder 2, %s15
      // Predicated region
      $region53: #{focal_loss.1} parent=5 // pred_check
        %p403 = pneg %p402
      $region54: #{focal_loss.1} parent=5 // pred_check_branch
        %405 = sbr.rel (%p403) target = $region56
      $region55: #{focal_loss.1} parent=5 // pred_region
        %s406 = ssub.s32 %s15, 2
      $region56: #{focal_loss.1} parent=5 // pred_fallthru
        _
    $region6: #{focal_loss.1} parent=1 // loop_footer
      %s19 = sadd.s32 1, %s15
    $region7: #{focal_loss.1} parent=1 // loop_footer_branch
      %14 = sbr.rel target = $region3
    $region8: #{focal_loss.1} parent=1 // loop_exit
      _
    %407 = vsyncpa [#allocation5], 1
    %s408 = scalar_lea.sflag [#allocation5], 1
    %409 = vsyncpa %s408, 1
    %410 = vsyncpa [#allocation8], 1
    %s411 = scalar_lea.sflag [#allocation8], 1
    %412 = vsyncpa %s411, 1
    %413 = vsyncpa [#allocation6], 1
    %s414 = scalar_lea.sflag [#allocation6], 1
    %415 = vsyncpa %s414, 1

</llo_original>
